<compile_context>
chip_gen: v6e
topology: v6e:2x2x1
jax: 0.10.0
libtpu: 0.0.40
codegen_flags: <defaults>
</compile_context>

<pallas_src>
import jax
import jax.numpy as jnp
from jax.experimental import pallas as pl
from jax.experimental.pallas import tpu as pltpu


# ---------------------------------------------------------------------------
# kernel
# ---------------------------------------------------------------------------
def _td3_value_kernel(x_ref, u_ref,
                      w1s_ref, w1a_ref, b1_ref,
                      w2_ref, b2_ref,
                      w3_ref, b3_ref,
                      out_ref):
    # layer 1 (both Q-branches fused along the output dim):
    #   h = relu([x | u] @ [W1 | W4] + [b1 | b4])
    # bf16 operands -> MXU native rate; accumulation + bias/ReLU stay in f32.
    h = (jnp.dot(x_ref[...], w1s_ref[...], preferred_element_type=jnp.float32)
         + jnp.dot(u_ref[...], w1a_ref[...], preferred_element_type=jnp.float32)
         + b1_ref[...])
    h = jnp.maximum(h, 0.0)

    # layer 2: block-diagonal diag(W2, W5) keeps the two branches independent.
    h = jnp.dot(h.astype(jnp.bfloat16), w2_ref[...],
                preferred_element_type=jnp.float32) + b2_ref[...]
    h = jnp.maximum(h, 0.0)

    # head: blockdiag(w3, w6) -> (tile_b, 2); col 0 = q1, col 1 = q2.
    q = jnp.dot(h.astype(jnp.bfloat16), w3_ref[...],
                preferred_element_type=jnp.float32) + b3_ref[...]
    out_ref[...] = q.astype(out_ref.dtype)


# ---------------------------------------------------------------------------
# host-side helpers
# ---------------------------------------------------------------------------
def _round_up(a, m):
    return ((a + m - 1) // m) * m


def fuse_td3_value_params(params, state_dim):
    """Build the fused weight set once, outside the forward hot path.

    Weights are stored in bf16 (MXU operands), biases in f32 (VPU adds)."""
    H = params["w2"].shape[0]
    f32, bf16 = jnp.float32, jnp.bfloat16

    w1f = jnp.concatenate([params["w1"], params["w4"]], axis=1)      # (num_inputs, 2H)
    w1s = w1f[:state_dim, :].astype(bf16)                            # (state_dim, 2H)
    w1a = w1f[state_dim:, :].astype(bf16)                            # (action_dim, 2H)
    b1f = jnp.concatenate([params["b1"], params["b4"]], axis=1).astype(f32)

    zHH = jnp.zeros((H, H), f32)
    w2f = jnp.block([[params["w2"], zHH],
                     [zHH, params["w5"]]]).astype(bf16)              # (2H, 2H)
    b2f = jnp.concatenate([params["b2"], params["b5"]], axis=1).astype(f32)

    zH1 = jnp.zeros((H, 1), f32)
    w3f = jnp.block([[params["w3"], zH1],
                     [zH1, params["w6"]]]).astype(bf16)              # (2H, 2)
    b3f = jnp.concatenate([params["b3"], params["b6"]], axis=1).astype(f32)

    return dict(w1s=w1s, w1a=w1a, b1=b1f, w2=w2f, b2=b2f, w3=w3f, b3=b3f)


def td3_value_forward(x, u, fused, *, max_tile_b=1024):
    """Equivalent of TD3Value.forward(x, u) -> (q1, q2), each (B, 1)."""
    B, state_dim = x.shape
    action_dim = u.shape[1]
    num_inputs = state_dim + action_dim
    H2 = fused["w2"].shape[0]                 # 2 * hidden_dim

    # ---- batch tiling ------------------------------------------------------
    # bf16 packs 16 rows per sublane group -> tile_b must be a multiple of 16.
    SUB = 16
    B16 = _round_up(B, SUB)
    if B16 >= 2 * SUB:
        # ~2 even tiles (capped) => few grid steps AND one tile per v7x TC.
        tile_b = min(_round_up(pl.cdiv(B16, 2), SUB), max_tile_b)
    else:
        tile_b = SUB
    Bp = _round_up(B, tile_b)
    n_tiles = Bp // tile_b

    xb = x.astype(jnp.bfloat16)
    ub = u.astype(jnp.bfloat16)
    if Bp != B:
        pad = Bp - B
        xb = jnp.pad(xb, ((0, pad), (0, 0)))
        ub = jnp.pad(ub, ((0, pad), (0, 0)))

    # ---- specs -------------------------------------------------------------
    act_map = lambda i: (i, 0)     # activation tiles march down the batch axis
    cst_map = lambda i: (0, 0)     # weights stay VMEM-resident across steps
    in_specs = [
        pl.BlockSpec((tile_b, state_dim), act_map),                  # x (bf16)
        pl.BlockSpec((tile_b, action_dim), act_map),                 # u (bf16)
        pl.BlockSpec((state_dim, H2), cst_map),                      # w1s (bf16)
        pl.BlockSpec((action_dim, H2), cst_map),                     # w1a (bf16)
        pl.BlockSpec((1, H2), cst_map),                              # b1 (f32)
        pl.BlockSpec((H2, H2), cst_map),                             # w2 block-diag
        pl.BlockSpec((1, H2), cst_map),                              # b2
        pl.BlockSpec((H2, 2), cst_map),                              # w3 block-diag
        pl.BlockSpec((1, 2), cst_map),                               # b3
    ]
    out_spec = pl.BlockSpec((tile_b, 2), act_map)

    # ---- cost hint so XLA overlaps this tiny kernel with neighbours --------
    flops = 2 * Bp * (num_inputs * H2 + H2 * H2 + H2 * 2)
    bytes_accessed = (
        Bp * num_inputs * 2                                # bf16 activations
        + (num_inputs * H2 + H2 * H2 + H2 * 2) * 2         # bf16 fused weights
        + (H2 + H2 + 2) * 4                                # f32 fused biases
        + Bp * 2 * 4                                       # f32 output
    )
    cost = pl.CostEstimate(flops=flops, transcendentals=0,
                           bytes_accessed=bytes_accessed)

    out = pl.pallas_call(
        _td3_value_kernel,
        out_shape=jax.ShapeDtypeStruct((Bp, 2), jnp.float32),
        grid=(n_tiles,),
        in_specs=in_specs,
        out_specs=out_spec,
        compiler_params=pltpu.CompilerParams(
            dimension_semantics=("parallel",)),
        cost_estimate=cost,
    )(xb, ub,
      fused["w1s"], fused["w1a"], fused["b1"],
      fused["w2"], fused["b2"],
      fused["w3"], fused["b3"])

    q = out[:B] if Bp != B else out            # (B, 2): col 0 = q1, col 1 = q2
    return q[:, 0:1], q[:, 1:2]


# ---------------------------------------------------------------------------
# parameter init (PyTorch nn.Linear-style uniform bounds), stored as (in, out)
# ---------------------------------------------------------------------------
def init_td3_value_params(key, num_inputs, hidden_dim):
    def linear(k, fan_in, fan_out):
        k_w, k_b = jax.random.split(k)
        bound = 1.0 / jnp.sqrt(float(fan_in))
        w = jax.random.uniform(k_w, (fan_in, fan_out), jnp.float32, -bound, bound)
        b = jax.random.uniform(k_b, (1, fan_out), jnp.float32, -bound, bound)
        return w, b

    keys = jax.random.split(key, 6)
    w1, b1 = linear(keys[0], num_inputs, hidden_dim)
    w2, b2 = linear(keys[1], hidden_dim, hidden_dim)
    w3, b3 = linear(keys[2], hidden_dim, 1)
    w4, b4 = linear(keys[3], num_inputs, hidden_dim)
    w5, b5 = linear(keys[4], hidden_dim, hidden_dim)
    w6, b6 = linear(keys[5], hidden_dim, 1)
    return dict(w1=w1, b1=b1, w2=w2, b2=b2, w3=w3, b3=b3,
                w4=w4, b4=b4, w5=w5, b5=b5, w6=w6, b6=b6)


def _reference_forward_f32(x, u, p):
    xu = jnp.concatenate([x, u], axis=1)
    h1 = jnp.maximum(xu @ p["w1"] + p["b1"], 0.0)
    h1 = jnp.maximum(h1 @ p["w2"] + p["b2"], 0.0)
    q1 = h1 @ p["w3"] + p["b3"]
    h2 = jnp.maximum(xu @ p["w4"] + p["b4"], 0.0)
    h2 = jnp.maximum(h2 @ p["w5"] + p["b5"], 0.0)
    q2 = h2 @ p["w6"] + p["b6"]
    return q1, q2


def _reference_forward_bf16(x, u, p):
    # Plain-JAX emulation of the kernel's numerics: bf16 matmul operands,
    # f32 accumulation, f32 bias/ReLU.
    bf = jnp.bfloat16

    def lin(h, w, b):
        return jnp.dot(h.astype(bf), w.astype(bf),
                       preferred_element_type=jnp.float32) + b

    xu = jnp.concatenate([x, u], axis=1)
    h1 = jnp.maximum(lin(xu, p["w1"], p["b1"]), 0.0)
    h1 = jnp.maximum(lin(h1, p["w2"], p["b2"]), 0.0)
    q1 = lin(h1, p["w3"], p["b3"])
    h2 = jnp.maximum(lin(xu, p["w4"], p["b4"]), 0.0)
    h2 = jnp.maximum(lin(h2, p["w5"], p["b5"]), 0.0)
    q2 = lin(h2, p["w6"], p["b6"])
    return q1, q2


if __name__ == "__main__":
    # num_inputs = state_dim + action_dim.  Batch sized to exercise the
    # 2-even-tile path (tile_b = 128, grid = (2,)).
    batch = 256
    state_dim = 12
    action_dim = 4
    num_inputs = state_dim + action_dim
    hidden_dim = 32

    key = jax.random.PRNGKey(0)
    k_x, k_u, k_p = jax.random.split(key, 3)
    x = jax.random.normal(k_x, (batch, state_dim), jnp.float32)
    u = jax.random.normal(k_u, (batch, action_dim), jnp.float32)
    params = init_td3_value_params(k_p, num_inputs, hidden_dim)
    fused = fuse_td3_value_params(params, state_dim)

    q1, q2 = td3_value_forward(x, u, fused)
    jax.block_until_ready((q1, q2))

    assert q1.shape == (batch, 1) and q2.shape == (batch, 1)

    # tight check against a bf16-emulated reference (same numerics as kernel)
    r1b, r2b = _reference_forward_bf16(x, u, params)
    assert jnp.allclose(q1, r1b, atol=2e-3), "q1 mismatch vs bf16 reference"
    assert jnp.allclose(q2, r2b, atol=2e-3), "q2 mismatch vs bf16 reference"

    # loose sanity check against the f32 (PyTorch-equivalent) reference
    r1, r2 = _reference_forward_f32(x, u, params)
    assert jnp.allclose(q1, r1, atol=5e-2, rtol=5e-2), "q1 drift vs f32 reference"
    assert jnp.allclose(q2, r2, atol=5e-2, rtol=5e-2), "q2 drift vs f32 reference"

    print("KERNEL_OK")
</pallas_src>

<mosaic_0001>
module attributes {stable_mosaic.version = 11 : i64} {
  func.func @_td3_value_kernel(%arg0: i32, %arg1: memref<128x12xbf16, #tpu.memory_space<vmem>>, %arg2: memref<128x4xbf16, #tpu.memory_space<vmem>>, %arg3: memref<12x64xbf16, #tpu.memory_space<vmem>>, %arg4: memref<4x64xbf16, #tpu.memory_space<vmem>>, %arg5: memref<1x64xf32, #tpu.memory_space<vmem>>, %arg6: memref<64x64xbf16, #tpu.memory_space<vmem>>, %arg7: memref<1x64xf32, #tpu.memory_space<vmem>>, %arg8: memref<64x2xbf16, #tpu.memory_space<vmem>>, %arg9: memref<1x2xf32, #tpu.memory_space<vmem>>, %arg10: memref<128x2xf32, #tpu.memory_space<vmem>>) attributes {dimension_semantics = [#tpu.dimension_semantics<parallel>], iteration_bounds = array<i64: 2>, scalar_prefetch = 0 : i64, scratch_operands = 0 : i64, tpu.core_type = #tpu.core_type<tc>, window_params = [{transform_indices = @transform_0, window_bounds = array<i64: 128, 12>}, {transform_indices = @transform_1, window_bounds = array<i64: 128, 4>}, {pipeline_mode = #tpu.pipeline_mode<synchronous>, transform_indices = @transform_2, window_bounds = array<i64: 12, 64>}, {pipeline_mode = #tpu.pipeline_mode<synchronous>, transform_indices = @transform_3, window_bounds = array<i64: 4, 64>}, {pipeline_mode = #tpu.pipeline_mode<synchronous>, transform_indices = @transform_4, window_bounds = array<i64: 1, 64>}, {pipeline_mode = #tpu.pipeline_mode<synchronous>, transform_indices = @transform_5, window_bounds = array<i64: 64, 64>}, {pipeline_mode = #tpu.pipeline_mode<synchronous>, transform_indices = @transform_6, window_bounds = array<i64: 1, 64>}, {pipeline_mode = #tpu.pipeline_mode<synchronous>, transform_indices = @transform_7, window_bounds = array<i64: 64, 2>}, {pipeline_mode = #tpu.pipeline_mode<synchronous>, transform_indices = @transform_8, window_bounds = array<i64: 1, 2>}, {transform_indices = @transform_9, window_bounds = array<i64: 128, 2>}]} {
    %c0 = arith.constant 0 : index
    %c0_0 = arith.constant 0 : index
    %0 = vector.load %arg1[%c0, %c0_0] : memref<128x12xbf16, #tpu.memory_space<vmem>>, vector<128x12xbf16>
    %c0_1 = arith.constant 0 : index
    %c0_2 = arith.constant 0 : index
    %1 = vector.load %arg3[%c0_1, %c0_2] : memref<12x64xbf16, #tpu.memory_space<vmem>>, vector<12x64xbf16>
    %cst = arith.constant dense<0.000000e+00> : vector<128x64xf32>
    %2 = tpu.matmul %0, %1, %cst {dimension_numbers = #tpu.dot_dimension_numbers<[1], [0], [0], [1], [0, 0, 1, 1], [], []>} : vector<128x12xbf16>, vector<12x64xbf16>, vector<128x64xf32> -> vector<128x64xf32>
    %c0_3 = arith.constant 0 : index
    %c0_4 = arith.constant 0 : index
    %3 = vector.load %arg2[%c0_3, %c0_4] : memref<128x4xbf16, #tpu.memory_space<vmem>>, vector<128x4xbf16>
    %c0_5 = arith.constant 0 : index
    %c0_6 = arith.constant 0 : index
    %4 = vector.load %arg4[%c0_5, %c0_6] : memref<4x64xbf16, #tpu.memory_space<vmem>>, vector<4x64xbf16>
    %cst_7 = arith.constant dense<0.000000e+00> : vector<128x64xf32>
    %5 = tpu.matmul %3, %4, %cst_7 {dimension_numbers = #tpu.dot_dimension_numbers<[1], [0], [0], [1], [0, 0, 1, 1], [], []>} : vector<128x4xbf16>, vector<4x64xbf16>, vector<128x64xf32> -> vector<128x64xf32>
    %6 = arith.addf %2, %5 : vector<128x64xf32>
    %c0_8 = arith.constant 0 : index
    %c0_9 = arith.constant 0 : index
    %7 = vector.load %arg5[%c0_8, %c0_9] : memref<1x64xf32, #tpu.memory_space<vmem>>, vector<1x64xf32>
    %8 = vector.broadcast %7 : vector<1x64xf32> to vector<128x64xf32>
    %9 = arith.addf %6, %8 : vector<128x64xf32>
    %cst_10 = arith.constant 0.000000e+00 : f32
    %10 = vector.broadcast %cst_10 : f32 to vector<128x64xf32>
    %11 = arith.maximumf %9, %10 : vector<128x64xf32>
    %12 = arith.truncf %11 : vector<128x64xf32> to vector<128x64xbf16>
    %c0_11 = arith.constant 0 : index
    %c0_12 = arith.constant 0 : index
    %13 = vector.load %arg6[%c0_11, %c0_12] : memref<64x64xbf16, #tpu.memory_space<vmem>>, vector<64x64xbf16>
    %cst_13 = arith.constant dense<0.000000e+00> : vector<128x64xf32>
    %14 = tpu.matmul %12, %13, %cst_13 {dimension_numbers = #tpu.dot_dimension_numbers<[1], [0], [0], [1], [0, 0, 1, 1], [], []>} : vector<128x64xbf16>, vector<64x64xbf16>, vector<128x64xf32> -> vector<128x64xf32>
    %c0_14 = arith.constant 0 : index
    %c0_15 = arith.constant 0 : index
    %15 = vector.load %arg7[%c0_14, %c0_15] : memref<1x64xf32, #tpu.memory_space<vmem>>, vector<1x64xf32>
    %16 = vector.broadcast %15 : vector<1x64xf32> to vector<128x64xf32>
    %17 = arith.addf %14, %16 : vector<128x64xf32>
    %cst_16 = arith.constant 0.000000e+00 : f32
    %18 = vector.broadcast %cst_16 : f32 to vector<128x64xf32>
    %19 = arith.maximumf %17, %18 : vector<128x64xf32>
    %20 = arith.truncf %19 : vector<128x64xf32> to vector<128x64xbf16>
    %c0_17 = arith.constant 0 : index
    %c0_18 = arith.constant 0 : index
    %21 = vector.load %arg8[%c0_17, %c0_18] : memref<64x2xbf16, #tpu.memory_space<vmem>>, vector<64x2xbf16>
    %cst_19 = arith.constant dense<0.000000e+00> : vector<128x2xf32>
    %22 = tpu.matmul %20, %21, %cst_19 {dimension_numbers = #tpu.dot_dimension_numbers<[1], [0], [0], [1], [0, 0, 1, 1], [], []>} : vector<128x64xbf16>, vector<64x2xbf16>, vector<128x2xf32> -> vector<128x2xf32>
    %c0_20 = arith.constant 0 : index
    %c0_21 = arith.constant 0 : index
    %23 = vector.load %arg9[%c0_20, %c0_21] : memref<1x2xf32, #tpu.memory_space<vmem>>, vector<1x2xf32>
    %24 = vector.broadcast %23 : vector<1x2xf32> to vector<128x2xf32>
    %25 = arith.addf %22, %24 : vector<128x2xf32>
    %c0_22 = arith.constant 0 : index
    %c0_23 = arith.constant 0 : index
    %26 = vector.load %arg10[%c0_22, %c0_23] : memref<128x2xf32, #tpu.memory_space<vmem>>, vector<128x2xf32>
    tpu.vector_store %arg10[%c0_22, %c0_23], %25 {strides = array<i32>} : memref<128x2xf32, #tpu.memory_space<vmem>>, vector<128x2xf32>,
    return
  }
  func.func @transform_0(%arg0: i32) -> (i32, i32) {
    %c0_i32 = arith.constant 0 : i32
    %c0_i32_0 = arith.constant 0 : i32
    return %arg0, %c0_i32 : i32, i32
  }
  func.func @transform_1(%arg0: i32) -> (i32, i32) {
    %c0_i32 = arith.constant 0 : i32
    %c0_i32_0 = arith.constant 0 : i32
    return %arg0, %c0_i32 : i32, i32
  }
  func.func @transform_2(%arg0: i32) -> (i32, i32) {
    %c0_i32 = arith.constant 0 : i32
    %c0_i32_0 = arith.constant 0 : i32
    %c0_i32_1 = arith.constant 0 : i32
    return %c0_i32, %c0_i32_0 : i32, i32
  }
  func.func @transform_3(%arg0: i32) -> (i32, i32) {
    %c0_i32 = arith.constant 0 : i32
    %c0_i32_0 = arith.constant 0 : i32
    %c0_i32_1 = arith.constant 0 : i32
    return %c0_i32, %c0_i32_0 : i32, i32
  }
  func.func @transform_4(%arg0: i32) -> (i32, i32) {
    %c0_i32 = arith.constant 0 : i32
    %c0_i32_0 = arith.constant 0 : i32
    %c0_i32_1 = arith.constant 0 : i32
    return %c0_i32, %c0_i32_0 : i32, i32
  }
  func.func @transform_5(%arg0: i32) -> (i32, i32) {
    %c0_i32 = arith.constant 0 : i32
    %c0_i32_0 = arith.constant 0 : i32
    %c0_i32_1 = arith.constant 0 : i32
    return %c0_i32, %c0_i32_0 : i32, i32
  }
  func.func @transform_6(%arg0: i32) -> (i32, i32) {
    %c0_i32 = arith.constant 0 : i32
    %c0_i32_0 = arith.constant 0 : i32
    %c0_i32_1 = arith.constant 0 : i32
    return %c0_i32, %c0_i32_0 : i32, i32
  }
  func.func @transform_7(%arg0: i32) -> (i32, i32) {
    %c0_i32 = arith.constant 0 : i32
    %c0_i32_0 = arith.constant 0 : i32
    %c0_i32_1 = arith.constant 0 : i32
    return %c0_i32, %c0_i32_0 : i32, i32
  }
  func.func @transform_8(%arg0: i32) -> (i32, i32) {
    %c0_i32 = arith.constant 0 : i32
    %c0_i32_0 = arith.constant 0 : i32
    %c0_i32_1 = arith.constant 0 : i32
    return %c0_i32, %c0_i32_0 : i32, i32
  }
  func.func @transform_9(%arg0: i32) -> (i32, i32) {
    %c0_i32 = arith.constant 0 : i32
    %c0_i32_0 = arith.constant 0 : i32
    return %arg0, %c0_i32 : i32, i32
  }
}

</mosaic_0001>

<llo_original>
// kernel: tpu_custom_call.1
$region0: #{tpu_custom_call.1}
  #allocation0 [shape = 'u32[]', space=smem, size = 0x4, offset = 0x4, fixed_abs, tag = 'smem constant byte address 0x4 - core index']
  #allocation1 [shape = 'u32[144,128]{1,0:T(1,128)}', space=vmem, size = 0x12000, scoped, tag = 'internal scratch']
  %s0 = inlined_call_operand.vmem [shape: bf16[256,12], index: 0, kind: input, shape index: {}]
  %s1 = inlined_call_operand.vmem [shape: bf16[256,4], index: 1, kind: input, shape index: {}]
  %s2 = inlined_call_operand.vmem [shape: bf16[12,64], index: 2, kind: input, shape index: {}]
  %s3 = inlined_call_operand.vmem [shape: bf16[4,64], index: 3, kind: input, shape index: {}]
  %s4 = inlined_call_operand.vmem [shape: f32[1,64], index: 4, kind: input, shape index: {}]
  %s5 = inlined_call_operand.vmem [shape: bf16[64,64], index: 5, kind: input, shape index: {}]
  %s6 = inlined_call_operand.vmem [shape: f32[1,64], index: 6, kind: input, shape index: {}]
  %s7 = inlined_call_operand.vmem [shape: bf16[64,2], index: 7, kind: input, shape index: {}]
  %s8 = inlined_call_operand.vmem [shape: f32[1,2], index: 8, kind: input, shape index: {}]
  %s9 = inlined_call_operand.vmem [shape: f32[256,2], index: 9, kind: output, shape index: {}]
  %s10 = sld [smem:[#allocation0]]
  $region69: #{tpu_custom_call.1} parent=0
    _
  %s12 = ssub.s32 1, %s10
  %s13 = scalar_select 0, %s12, %s10
  loop: start=0, step=1, limit=4
  $region2: #{tpu_custom_call.1} parent=0 // loop_pre_header
    _
  $region3: #{tpu_custom_call.1} parent=0 // loop_header
    %s15 = sphi 0, %s19
    %p16 = scmp.ge.s32.totalorder %s15, 4
    %s25 = sphi 0, %s27
    %s28 = sphi 0, %s25
    %s29 = sphi 0, %s28
    %s45 = sphi 0, %s29
    %s51 = sphi 0, %s53
    %s54 = sphi 0, %s51
    %s55 = sphi 0, %s54
    %s71 = sphi 0, %s55
    %s75 = sphi 0, %s75
    %s77 = sphi 0, %s75
    %s78 = sphi 0, %s77
    %s92 = sphi 0, %s78
    %s96 = sphi 0, %s96
    %s98 = sphi 0, %s96
    %s99 = sphi 0, %s98
    %s113 = sphi 0, %s99
    %s117 = sphi 0, %s117
    %s119 = sphi 0, %s117
    %s120 = sphi 0, %s119
    %s134 = sphi 0, %s120
    %s138 = sphi 0, %s138
    %s140 = sphi 0, %s138
    %s141 = sphi 0, %s140
    %s155 = sphi 0, %s141
    %s159 = sphi 0, %s159
    %s161 = sphi 0, %s159
    %s162 = sphi 0, %s161
    %s176 = sphi 0, %s162
    %s180 = sphi 0, %s180
    %s182 = sphi 0, %s180
    %s183 = sphi 0, %s182
    %s197 = sphi 0, %s183
    %s201 = sphi 0, %s201
    %s203 = sphi 0, %s201
    %s204 = sphi 0, %s203
    %s218 = sphi 0, %s204
    %s224 = sphi 0, %s226
    %s227 = sphi 0, %s224
    %s228 = sphi 0, %s227
    %s244 = sphi 0, %s228
  $region4: #{tpu_custom_call.1} parent=0 // loop_header_branch
    %18 = sbr.rel (%p16) target = $region8
  $region5: #{tpu_custom_call.1} parent=0 // loop_body
    %s20 = ssub.s32 %s15, 1
    %s21 = ssub.s32 %s15, 2
    %s22 = sadd.s32 %s15, 1
    %s23 = ssub.s32 %s15, %s22
    %p24 = scmp.eq.s32.totalorder %s23, 0
    %s26 = sadd.s32 %s25, 1
    %s27 = scalar_select %p24, %s25, %s26
    %p30 = pneg %p24
    %p31 = scmp.eq.s32.totalorder %s15, 1
    %p32 = por %p30, %p31
    %p33 = scmp.ne.s32.totalorder %s25, %s28
    %p34 = scmp.eq.s32.totalorder %s15, 0
    %p35 = por %p33, %p34
    %p36 = scmp.ne.s32.totalorder %s25, %s28
    %p37 = scmp.eq.s32.totalorder %s20, 1
    %p38 = por %p36, %p37
    %p39 = scmp.ne.s32.totalorder %s28, %s29
    %p40 = scmp.eq.s32.totalorder %s20, 0
    %p41 = por %p39, %p40
    %p42 = scmp.ne.s32.totalorder %s28, %s29
    %p43 = scmp.eq.s32.totalorder %s21, 1
    %p44 = por %p42, %p43
    %p46 = scmp.ne.s32.totalorder %s29, %s45
    %p47 = scmp.eq.s32.totalorder %s21, 0
    %p48 = por %p46, %p47
    %s49 = ssub.s32 %s15, %s22
    %p50 = scmp.eq.s32.totalorder %s49, 0
    %s52 = sadd.s32 %s51, 1
    %s53 = scalar_select %p50, %s51, %s52
    %p56 = pneg %p50
    %p57 = scmp.eq.s32.totalorder %s15, 1
    %p58 = por %p56, %p57
    %p59 = scmp.ne.s32.totalorder %s51, %s54
    %p60 = scmp.eq.s32.totalorder %s15, 0
    %p61 = por %p59, %p60
    %p62 = scmp.ne.s32.totalorder %s51, %s54
    %p63 = scmp.eq.s32.totalorder %s20, 1
    %p64 = por %p62, %p63
    %p65 = scmp.ne.s32.totalorder %s54, %s55
    %p66 = scmp.eq.s32.totalorder %s20, 0
    %p67 = por %p65, %p66
    %p68 = scmp.ne.s32.totalorder %s54, %s55
    %p69 = scmp.eq.s32.totalorder %s21, 1
    %p70 = por %p68, %p69
    %p72 = scmp.ne.s32.totalorder %s55, %s71
    %p73 = scmp.eq.s32.totalorder %s21, 0
    %p74 = por %p72, %p73
    %s76 = sadd.s32 %s75, 1
    %p79 = scmp.eq.s32.totalorder %s15, 1
    %p80 = scmp.ne.s32.totalorder %s75, %s77
    %p81 = scmp.eq.s32.totalorder %s15, 0
    %p82 = por %p80, %p81
    %p83 = scmp.ne.s32.totalorder %s75, %s77
    %p84 = scmp.eq.s32.totalorder %s20, 1
    %p85 = por %p83, %p84
    %p86 = scmp.ne.s32.totalorder %s77, %s78
    %p87 = scmp.eq.s32.totalorder %s20, 0
    %p88 = por %p86, %p87
    %p89 = scmp.ne.s32.totalorder %s77, %s78
    %p90 = scmp.eq.s32.totalorder %s21, 1
    %p91 = por %p89, %p90
    %p93 = scmp.ne.s32.totalorder %s78, %s92
    %p94 = scmp.eq.s32.totalorder %s21, 0
    %p95 = por %p93, %p94
    %s97 = sadd.s32 %s96, 1
    %p100 = scmp.eq.s32.totalorder %s15, 1
    %p101 = scmp.ne.s32.totalorder %s96, %s98
    %p102 = scmp.eq.s32.totalorder %s15, 0
    %p103 = por %p101, %p102
    %p104 = scmp.ne.s32.totalorder %s96, %s98
    %p105 = scmp.eq.s32.totalorder %s20, 1
    %p106 = por %p104, %p105
    %p107 = scmp.ne.s32.totalorder %s98, %s99
    %p108 = scmp.eq.s32.totalorder %s20, 0
    %p109 = por %p107, %p108
    %p110 = scmp.ne.s32.totalorder %s98, %s99
    %p111 = scmp.eq.s32.totalorder %s21, 1
    %p112 = por %p110, %p111
    %p114 = scmp.ne.s32.totalorder %s99, %s113
    %p115 = scmp.eq.s32.totalorder %s21, 0
    %p116 = por %p114, %p115
    %s118 = sadd.s32 %s117, 1
    %p121 = scmp.eq.s32.totalorder %s15, 1
    %p122 = scmp.ne.s32.totalorder %s117, %s119
    %p123 = scmp.eq.s32.totalorder %s15, 0
    %p124 = por %p122, %p123
    %p125 = scmp.ne.s32.totalorder %s117, %s119
    %p126 = scmp.eq.s32.totalorder %s20, 1
    %p127 = por %p125, %p126
    %p128 = scmp.ne.s32.totalorder %s119, %s120
    %p129 = scmp.eq.s32.totalorder %s20, 0
    %p130 = por %p128, %p129
    %p131 = scmp.ne.s32.totalorder %s119, %s120
    %p132 = scmp.eq.s32.totalorder %s21, 1
    %p133 = por %p131, %p132
    %p135 = scmp.ne.s32.totalorder %s120, %s134
    %p136 = scmp.eq.s32.totalorder %s21, 0
    %p137 = por %p135, %p136
    %s139 = sadd.s32 %s138, 1
    %p142 = scmp.eq.s32.totalorder %s15, 1
    %p143 = scmp.ne.s32.totalorder %s138, %s140
    %p144 = scmp.eq.s32.totalorder %s15, 0
    %p145 = por %p143, %p144
    %p146 = scmp.ne.s32.totalorder %s138, %s140
    %p147 = scmp.eq.s32.totalorder %s20, 1
    %p148 = por %p146, %p147
    %p149 = scmp.ne.s32.totalorder %s140, %s141
    %p150 = scmp.eq.s32.totalorder %s20, 0
    %p151 = por %p149, %p150
    %p152 = scmp.ne.s32.totalorder %s140, %s141
    %p153 = scmp.eq.s32.totalorder %s21, 1
    %p154 = por %p152, %p153
    %p156 = scmp.ne.s32.totalorder %s141, %s155
    %p157 = scmp.eq.s32.totalorder %s21, 0
    %p158 = por %p156, %p157
    %s160 = sadd.s32 %s159, 1
    %p163 = scmp.eq.s32.totalorder %s15, 1
    %p164 = scmp.ne.s32.totalorder %s159, %s161
    %p165 = scmp.eq.s32.totalorder %s15, 0
    %p166 = por %p164, %p165
    %p167 = scmp.ne.s32.totalorder %s159, %s161
    %p168 = scmp.eq.s32.totalorder %s20, 1
    %p169 = por %p167, %p168
    %p170 = scmp.ne.s32.totalorder %s161, %s162
    %p171 = scmp.eq.s32.totalorder %s20, 0
    %p172 = por %p170, %p171
    %p173 = scmp.ne.s32.totalorder %s161, %s162
    %p174 = scmp.eq.s32.totalorder %s21, 1
    %p175 = por %p173, %p174
    %p177 = scmp.ne.s32.totalorder %s162, %s176
    %p178 = scmp.eq.s32.totalorder %s21, 0
    %p179 = por %p177, %p178
    %s181 = sadd.s32 %s180, 1
    %p184 = scmp.eq.s32.totalorder %s15, 1
    %p185 = scmp.ne.s32.totalorder %s180, %s182
    %p186 = scmp.eq.s32.totalorder %s15, 0
    %p187 = por %p185, %p186
    %p188 = scmp.ne.s32.totalorder %s180, %s182
    %p189 = scmp.eq.s32.totalorder %s20, 1
    %p190 = por %p188, %p189
    %p191 = scmp.ne.s32.totalorder %s182, %s183
    %p192 = scmp.eq.s32.totalorder %s20, 0
    %p193 = por %p191, %p192
    %p194 = scmp.ne.s32.totalorder %s182, %s183
    %p195 = scmp.eq.s32.totalorder %s21, 1
    %p196 = por %p194, %p195
    %p198 = scmp.ne.s32.totalorder %s183, %s197
    %p199 = scmp.eq.s32.totalorder %s21, 0
    %p200 = por %p198, %p199
    %s202 = sadd.s32 %s201, 1
    %p205 = scmp.eq.s32.totalorder %s15, 1
    %p206 = scmp.ne.s32.totalorder %s201, %s203
    %p207 = scmp.eq.s32.totalorder %s15, 0
    %p208 = por %p206, %p207
    %p209 = scmp.ne.s32.totalorder %s201, %s203
    %p210 = scmp.eq.s32.totalorder %s20, 1
    %p211 = por %p209, %p210
    %p212 = scmp.ne.s32.totalorder %s203, %s204
    %p213 = scmp.eq.s32.totalorder %s20, 0
    %p214 = por %p212, %p213
    %p215 = scmp.ne.s32.totalorder %s203, %s204
    %p216 = scmp.eq.s32.totalorder %s21, 1
    %p217 = por %p215, %p216
    %p219 = scmp.ne.s32.totalorder %s204, %s218
    %p220 = scmp.eq.s32.totalorder %s21, 0
    %p221 = por %p219, %p220
    %s222 = ssub.s32 %s15, %s22
    %p223 = scmp.eq.s32.totalorder %s222, 0
    %s225 = sadd.s32 %s224, 1
    %s226 = scalar_select %p223, %s224, %s225
    %p229 = pneg %p223
    %p230 = scmp.eq.s32.totalorder %s15, 1
    %p231 = por %p229, %p230
    %p232 = scmp.ne.s32.totalorder %s224, %s227
    %p233 = scmp.eq.s32.totalorder %s15, 0
    %p234 = por %p232, %p233
    %p235 = scmp.ne.s32.totalorder %s224, %s227
    %p236 = scmp.eq.s32.totalorder %s20, 1
    %p237 = por %p235, %p236
    %p238 = scmp.ne.s32.totalorder %s227, %s228
    %p239 = scmp.eq.s32.totalorder %s20, 0
    %p240 = por %p238, %p239
    %p241 = scmp.ne.s32.totalorder %s227, %s228
    %p242 = scmp.eq.s32.totalorder %s21, 1
    %p243 = por %p241, %p242
    %p245 = scmp.ne.s32.totalorder %s228, %s244
    %p246 = scmp.eq.s32.totalorder %s21, 0
    %p247 = por %p245, %p246
    %p248 = scmp.le.s32.totalorder 1, %s15
    %p249 = scmp.lt.s32.totalorder %s15, 3
    %p250 = pnand %p248, %p249
    %p251 = pneg %p250
    // Predicated region
    $region9: #{tpu_custom_call.1} parent=5 // pred_check
      _
    $region10: #{tpu_custom_call.1} parent=5 // pred_check_branch
      %253 = sbr.rel (%p250) target = $region12
    $region11: #{tpu_custom_call.1} parent=5 // pred_region
      %s254 = ssub.s32 %s15, 1
      // Predicated region
      $region13: #{tpu_custom_call.1} parent=11 // pred_check
        %p255 = pneg %p88
      $region14: #{tpu_custom_call.1} parent=11 // pred_check_branch
        %257 = sbr.rel (%p255) target = $region16
      $region15: #{tpu_custom_call.1} parent=11 // pred_region
        _
      $region16: #{tpu_custom_call.1} parent=11 // pred_fallthru
        _
      // Predicated region
      $region17: #{tpu_custom_call.1} parent=11 // pred_check
        %p258 = pneg %p109
      $region18: #{tpu_custom_call.1} parent=11 // pred_check_branch
        %260 = sbr.rel (%p258) target = $region20
      $region19: #{tpu_custom_call.1} parent=11 // pred_region
        _
      $region20: #{tpu_custom_call.1} parent=11 // pred_fallthru
        _
      // Predicated region
      $region21: #{tpu_custom_call.1} parent=11 // pred_check
        %p261 = pneg %p130
      $region22: #{tpu_custom_call.1} parent=11 // pred_check_branch
        %263 = sbr.rel (%p261) target = $region24
      $region23: #{tpu_custom_call.1} parent=11 // pred_region
        _
      $region24: #{tpu_custom_call.1} parent=11 // pred_fallthru
        _
      // Predicated region
      $region25: #{tpu_custom_call.1} parent=11 // pred_check
        %p264 = pneg %p151
      $region26: #{tpu_custom_call.1} parent=11 // pred_check_branch
        %266 = sbr.rel (%p264) target = $region28
      $region27: #{tpu_custom_call.1} parent=11 // pred_region
        _
      $region28: #{tpu_custom_call.1} parent=11 // pred_fallthru
        _
      // Predicated region
      $region29: #{tpu_custom_call.1} parent=11 // pred_check
        %p267 = pneg %p172
      $region30: #{tpu_custom_call.1} parent=11 // pred_check_branch
        %269 = sbr.rel (%p267) target = $region32
      $region31: #{tpu_custom_call.1} parent=11 // pred_region
        _
      $region32: #{tpu_custom_call.1} parent=11 // pred_fallthru
        _
      // Predicated region
      $region33: #{tpu_custom_call.1} parent=11 // pred_check
        %p270 = pneg %p193
      $region34: #{tpu_custom_call.1} parent=11 // pred_check_branch
        %272 = sbr.rel (%p270) target = $region36
      $region35: #{tpu_custom_call.1} parent=11 // pred_region
        _
      $region36: #{tpu_custom_call.1} parent=11 // pred_fallthru
        _
      // Predicated region
      $region37: #{tpu_custom_call.1} parent=11 // pred_check
        %p273 = pneg %p214
      $region38: #{tpu_custom_call.1} parent=11 // pred_check_branch
        %275 = sbr.rel (%p273) target = $region40
      $region39: #{tpu_custom_call.1} parent=11 // pred_region
        _
      $region40: #{tpu_custom_call.1} parent=11 // pred_fallthru
        _
    $region12: #{tpu_custom_call.1} parent=5 // pred_fallthru
      _
    %p276 = scmp.lt.s32.totalorder %s15, 2
    // Predicated region
    $region41: #{tpu_custom_call.1} parent=5 // pred_check
      %p277 = pneg %p276
    $region42: #{tpu_custom_call.1} parent=5 // pred_check_branch
      %279 = sbr.rel (%p277) target = $region44
    $region43: #{tpu_custom_call.1} parent=5 // pred_region
      // Predicated region
      $region45: #{tpu_custom_call.1} parent=43 // pred_check
        %p280 = pneg %p35
      $region46: #{tpu_custom_call.1} parent=43 // pred_check_branch
        %282 = sbr.rel (%p280) target = $region48
      $region47: #{tpu_custom_call.1} parent=43 // pred_region
        %s283 = smul.u32 16, %s15
        %p284 = scmp.lt.s32.totalorder %s283, 31
        %s285 = scalar_select %p284, %s283, 31
        %s286 = smul.addr %s285, 4
        %s287 = scalar_lea.vmem %s0, %s286
        %s288 = smul.u32 16, %s15
      $region48: #{tpu_custom_call.1} parent=43 // pred_fallthru
        _
      // Predicated region
      $region49: #{tpu_custom_call.1} parent=43 // pred_check
        %p289 = pneg %p61
      $region50: #{tpu_custom_call.1} parent=43 // pred_check_branch
        %291 = sbr.rel (%p289) target = $region52
      $region51: #{tpu_custom_call.1} parent=43 // pred_region
        %s292 = smul.u32 16, %s15
        %p293 = scmp.lt.s32.totalorder %s292, 31
        %s294 = scalar_select %p293, %s292, 31
        %s295 = smul.addr %s294, 4
        %s296 = scalar_lea.vmem %s1, %s295
        %s297 = smul.u32 16, %s15
      $region52: #{tpu_custom_call.1} parent=43 // pred_fallthru
        _
    $region44: #{tpu_custom_call.1} parent=5 // pred_fallthru
      _
    %p298 = scmp.le.s32.totalorder 1, %s15
    %p299 = scmp.lt.s32.totalorder %s15, 3
    %p300 = pnand %p298, %p299
    %p301 = pneg %p300
    // Predicated region
    $region53: #{tpu_custom_call.1} parent=5 // pred_check
      _
    $region54: #{tpu_custom_call.1} parent=5 // pred_check_branch
      %303 = sbr.rel (%p300) target = $region56
    $region55: #{tpu_custom_call.1} parent=5 // pred_region
      %s304 = ssub.s32 %s15, 1
      %s305 = smul.u32 16, %s20
      %p306 = scmp.lt.s32.totalorder %s305, 31
      %s307 = scalar_select %p306, %s305, 31
      %s308 = smul.addr %s307, 4
      %s309 = scalar_lea.vmem %s0, %s308
      %p310 = pneg %p41
      %p311 = pneg %p38
      %s312 = smul.u32 16, %s20
      %p313 = scmp.lt.s32.totalorder %s312, 31
      %s314 = scalar_select %p313, %s312, 31
      %s315 = smul.addr %s314, 4
      %s316 = scalar_lea.vmem %s1, %s315
      %p317 = pneg %p67
      %p318 = pneg %p64
      %p319 = pneg %p88
      %p320 = pneg %p85
      %p321 = pneg %p109
      %p322 = pneg %p106
      %p323 = pneg %p130
      %p324 = pneg %p127
      %p325 = pneg %p151
      %p326 = pneg %p148
      %p327 = pneg %p172
      %p328 = pneg %p169
      %p329 = pneg %p193
      %p330 = pneg %p190
      %p331 = pneg %p214
      %p332 = pneg %p211
      %p333 = pneg %p240
      %p334 = pneg %p237
      %s335 = smul.u32 16, %s20
      %p336 = scmp.lt.s32.totalorder %s335, 31
      %s337 = scalar_select %p336, %s335, 31
      %s338 = smul.addr %s337, 8
      %s339 = scalar_lea.vmem %s9, %s338
      %s340 = smul.u32 16, %s20
      %p341 = scmp.lt.s32.totalorder %s340, 31
      %s342 = scalar_select %p341, %s340, 31
      %s343 = smul.addr %s342, 4
      %s344 = scalar_lea.vmem %s0, %s343
      %s345 = smul.u32 16, %s20
      %s346 = smul.u32 16, %s20
      %p347 = scmp.lt.s32.totalorder %s346, 31
      %s348 = scalar_select %p347, %s346, 31
      %s349 = smul.addr %s348, 4
      %s350 = scalar_lea.vmem %s1, %s349
      %s351 = smul.u32 16, %s20
      %s352 = smul.u32 16, %s20
      %p353 = scmp.lt.s32.totalorder %s352, 31
      %s354 = scalar_select %p353, %s352, 31
      %s355 = smul.addr %s354, 8
      %s356 = scalar_lea.vmem %s9, %s355
      %s357 = smul.u32 16, %s20
      %v359 = vld [vmem:[%s344] sm:$0xf]
      %v360 = vld [vmem:[%s344 + $0x4] sm:$0xf]
      %v361 = vld [vmem:[%s344 + $0x8] sm:$0xf]
      %v362 = vld [vmem:[%s344 + $0xc] sm:$0xf]
      %v363 = vld [vmem:[%s344 + $0x10] sm:$0xf]
      %v364 = vld [vmem:[%s344 + $0x14] sm:$0xf]
      %v365 = vld [vmem:[%s344 + $0x18] sm:$0xf]
      %v366 = vld [vmem:[%s344 + $0x1c] sm:$0xf]
      %v367 = vld [vmem:[%s344 + $0x20] sm:$0xf]
      %v368 = vld [vmem:[%s344 + $0x24] sm:$0xf]
      %v369 = vld [vmem:[%s344 + $0x28] sm:$0xf]
      %v370 = vld [vmem:[%s344 + $0x2c] sm:$0xf]
      %v371 = vld [vmem:[%s344 + $0x30] sm:$0xf]
      %v372 = vld [vmem:[%s344 + $0x34] sm:$0xf]
      %v373 = vld [vmem:[%s344 + $0x38] sm:$0xf]
      %v374 = vld [vmem:[%s344 + $0x3c] sm:$0xf]
      %v375 = vld [vmem:[%s2] sm:$0xf]
      %v376 = vld [vmem:[%s2 + $0x4] sm:$0x3]
      %v377 = vld [vmem:[%s350] sm:$0xf]
      %v378 = vld [vmem:[%s350 + $0x4] sm:$0xf]
      %v379 = vld [vmem:[%s350 + $0x8] sm:$0xf]
      %v380 = vld [vmem:[%s350 + $0xc] sm:$0xf]
      %v381 = vld [vmem:[%s350 + $0x10] sm:$0xf]
      %v382 = vld [vmem:[%s350 + $0x14] sm:$0xf]
      %v383 = vld [vmem:[%s350 + $0x18] sm:$0xf]
      %v384 = vld [vmem:[%s350 + $0x1c] sm:$0xf]
      %v385 = vld [vmem:[%s350 + $0x20] sm:$0xf]
      %v386 = vld [vmem:[%s350 + $0x24] sm:$0xf]
      %v387 = vld [vmem:[%s350 + $0x28] sm:$0xf]
      %v388 = vld [vmem:[%s350 + $0x2c] sm:$0xf]
      %v389 = vld [vmem:[%s350 + $0x30] sm:$0xf]
      %v390 = vld [vmem:[%s350 + $0x34] sm:$0xf]
      %v391 = vld [vmem:[%s350 + $0x38] sm:$0xf]
      %v392 = vld [vmem:[%s350 + $0x3c] sm:$0xf]
      %v393 = vld [vmem:[%s3] sm:$0x3]
      %v410 = vunpack.c.l.b16 %v377
      %v411 = vunpack.c.l.b16 %v378
      %v412 = vunpack.c.l.b16 %v379
      %v413 = vunpack.c.l.b16 %v380
      %v414 = vunpack.c.l.b16 %v381
      %v415 = vunpack.c.l.b16 %v382
      %v416 = vunpack.c.l.b16 %v383
      %v417 = vunpack.c.l.b16 %v384
      %v418 = vunpack.c.l.b16 %v385
      %v419 = vunpack.c.l.b16 %v386
      %v420 = vunpack.c.l.b16 %v387
      %v421 = vunpack.c.l.b16 %v388
      %v422 = vunpack.c.l.b16 %v389
      %v423 = vunpack.c.l.b16 %v390
      %v424 = vunpack.c.l.b16 %v391
      %v425 = vunpack.c.l.b16 %v392
      %v426 = vpack.c.b16 %v411, %v410
      %v427 = vpack.c.b16 %v413, %v412
      %v428 = vpack.c.b16 %v415, %v414
      %v429 = vpack.c.b16 %v417, %v416
      %v430 = vpack.c.b16 %v419, %v418
      %v431 = vpack.c.b16 %v421, %v420
      %v432 = vpack.c.b16 %v423, %v422
      %v433 = vpack.c.b16 %v425, %v424
      %vm434 = vcmask 31744
      %v436 = vsel %vm434, %v426, 0
      %v439 = vsel %vm434, %v427, 0
      %v442 = vsel %vm434, %v428, 0
      %v445 = vsel %vm434, %v429, 0
      %v448 = vsel %vm434, %v430, 0
      %v451 = vsel %vm434, %v431, 0
      %v454 = vsel %vm434, %v432, 0
      %v457 = vsel %vm434, %v433, 0
      %vm459 = vcmask 1041408
      %v461 = vsel %vm459, %v393, 0
      %463 = vmatprep.subr.bf16.mxu0 0
      %464 = vmatpush1.bf16.msra.mxu0 0
      %465 = vmatprep.subr.bf16.mxu0 0
      %466 = vmatpush1.bf16.msra.mxu0 0
      %467 = vmatprep.subr.bf16.mxu0 0
      %468 = vmatpush1.bf16.msra.mxu0 0
      %469 = vmatprep.subr.bf16.mxu0 0
      %470 = vmatpush1.bf16.msra.mxu0 0
      %471 = vmatprep.subr.bf16.mxu0 0
      %472 = vmatpush1.bf16.msra.mxu0 0
      %473 = vmatprep.subr.bf16.mxu0 0
      %474 = vmatpush1.bf16.msra.mxu0 0
      %475 = vmatprep.subr.bf16.mxu0 0
      %476 = vmatpush1.bf16.msra.mxu0 0
      %477 = vmatprep.subr.bf16.mxu0 0
      %478 = vmatpush1.bf16.msra.mxu0 %v461
      %479 = vmatprep.subr.bf16.mxu0 0
      %480 = vmatpush2.bf16.msra.mxu0 0
      %481 = vmatprep.subr.bf16.mxu0 0
      %482 = vmatpush2.bf16.msra.mxu0 0
      %483 = vmatprep.subr.bf16.mxu0 0
      %484 = vmatpush2.bf16.msra.mxu0 0
      %485 = vmatprep.subr.bf16.mxu0 0
      %486 = vmatpush2.bf16.msra.mxu0 0
      %487 = vmatprep.subr.bf16.mxu0 0
      %488 = vmatpush2.bf16.msra.mxu0 0
      %489 = vmatprep.subr.bf16.mxu0 0
      %490 = vmatpush2.bf16.msra.mxu0 0
      %491 = vmatprep.subr.bf16.mxu0 0
      %492 = vmatpush2.bf16.msra.mxu0 0
      %493 = vmatprep.subr.bf16.mxu0 0
      %494 = vmatpush2.bf16.msra.mxu0 0
      %495 = vmatprep.mubr.bf16.mxu0 0
      %496 = vmatmul.mubr.bf16.gmra.mxu0 %v436
      %v497 = vpop.f32.mrf.mxu0
      %v498 = vadd.f32 0.0, %v497
      %v499 = vpop.f32.mrf.mxu0
      %v500 = vpop.f32.mrf.mxu0
      %v501 = vadd.f32 0.0, %v500
      %v502 = vpop.f32.mrf.mxu0
      %503 = vmatprep.mubr.bf16.mxu0 0
      %504 = vmatmul.mubr.bf16.gmra.mxu0 %v439
      %v505 = vpop.f32.mrf.mxu0
      %v506 = vadd.f32 0.0, %v505
      %v507 = vpop.f32.mrf.mxu0
      %v508 = vpop.f32.mrf.mxu0
      %v509 = vadd.f32 0.0, %v508
      %v510 = vpop.f32.mrf.mxu0
      %511 = vmatprep.mubr.bf16.mxu0 0
      %512 = vmatmul.mubr.bf16.gmra.mxu0 %v442
      %v513 = vpop.f32.mrf.mxu0
      %v514 = vadd.f32 0.0, %v513
      %v515 = vpop.f32.mrf.mxu0
      %v516 = vpop.f32.mrf.mxu0
      %v517 = vadd.f32 0.0, %v516
      %v518 = vpop.f32.mrf.mxu0
      %519 = vmatprep.mubr.bf16.mxu0 0
      %520 = vmatmul.mubr.bf16.gmra.mxu0 %v445
      %v521 = vpop.f32.mrf.mxu0
      %v522 = vadd.f32 0.0, %v521
      %v523 = vpop.f32.mrf.mxu0
      %v524 = vpop.f32.mrf.mxu0
      %v525 = vadd.f32 0.0, %v524
      %v526 = vpop.f32.mrf.mxu0
      %527 = vmatprep.mubr.bf16.mxu0 0
      %528 = vmatmul.mubr.bf16.gmra.mxu0 %v448
      %v529 = vpop.f32.mrf.mxu0
      %v530 = vadd.f32 0.0, %v529
      %v531 = vpop.f32.mrf.mxu0
      %v532 = vpop.f32.mrf.mxu0
      %v533 = vadd.f32 0.0, %v532
      %v534 = vpop.f32.mrf.mxu0
      %535 = vmatprep.mubr.bf16.mxu0 0
      %536 = vmatmul.mubr.bf16.gmra.mxu0 %v451
      %v537 = vpop.f32.mrf.mxu0
      %v538 = vadd.f32 0.0, %v537
      %v539 = vpop.f32.mrf.mxu0
      %v540 = vpop.f32.mrf.mxu0
      %v541 = vadd.f32 0.0, %v540
      %v542 = vpop.f32.mrf.mxu0
      %543 = vmatprep.mubr.bf16.mxu0 0
      %544 = vmatmul.mubr.bf16.gmra.mxu0 %v454
      %v545 = vpop.f32.mrf.mxu0
      %v546 = vadd.f32 0.0, %v545
      %v547 = vpop.f32.mrf.mxu0
      %v548 = vpop.f32.mrf.mxu0
      %v549 = vadd.f32 0.0, %v548
      %v550 = vpop.f32.mrf.mxu0
      %551 = vmatprep.mubr.bf16.mxu0 0
      %552 = vmatmul.mubr.bf16.gmra.mxu0 %v457
      %v553 = vpop.f32.mrf.mxu0
      %v554 = vadd.f32 0.0, %v553
      %v555 = vpop.f32.mrf.mxu0
      %v556 = vpop.f32.mrf.mxu0
      %v557 = vadd.f32 0.0, %v556
      %v558 = vpop.f32.mrf.mxu0
      %559 = vdwg.mxu0
      %v576 = vunpack.c.l.b16 %v359
      %v577 = vunpack.c.l.b16 %v360
      %v578 = vunpack.c.l.b16 %v361
      %v579 = vunpack.c.l.b16 %v362
      %v580 = vunpack.c.l.b16 %v363
      %v581 = vunpack.c.l.b16 %v364
      %v582 = vunpack.c.l.b16 %v365
      %v583 = vunpack.c.l.b16 %v366
      %v584 = vunpack.c.l.b16 %v367
      %v585 = vunpack.c.l.b16 %v368
      %v586 = vunpack.c.l.b16 %v369
      %v587 = vunpack.c.l.b16 %v370
      %v588 = vunpack.c.l.b16 %v371
      %v589 = vunpack.c.l.b16 %v372
      %v590 = vunpack.c.l.b16 %v373
      %v591 = vunpack.c.l.b16 %v374
      %v592 = vpack.c.b16 %v577, %v576
      %v593 = vpack.c.b16 %v579, %v578
      %v594 = vpack.c.b16 %v581, %v580
      %v595 = vpack.c.b16 %v583, %v582
      %v596 = vpack.c.b16 %v585, %v584
      %v597 = vpack.c.b16 %v587, %v586
      %v598 = vpack.c.b16 %v589, %v588
      %v599 = vpack.c.b16 %v591, %v590
      %v602 = vunpack.c.l.b16 %v375
      %v603 = vunpack.c.l.b16 %v376
      %v604 = vpack.c.b16 %v603, %v602
      %vm605 = vcmask 97280
      %v607 = vsel %vm605, %v592, 0
      %v610 = vsel %vm605, %v593, 0
      %v613 = vsel %vm605, %v594, 0
      %v616 = vsel %vm605, %v595, 0
      %v619 = vsel %vm605, %v596, 0
      %v622 = vsel %vm605, %v597, 0
      %v625 = vsel %vm605, %v598, 0
      %v628 = vsel %vm605, %v599, 0
      %vm630 = vcmask 1045504
      %v632 = vsel %vm630, %v604, 0
      %634 = vmatprep.subr.bf16.mxu0 0
      %635 = vmatpush1.bf16.msra.mxu0 0
      %636 = vmatprep.subr.bf16.mxu0 0
      %637 = vmatpush1.bf16.msra.mxu0 0
      %638 = vmatprep.subr.bf16.mxu0 0
      %639 = vmatpush1.bf16.msra.mxu0 0
      %640 = vmatprep.subr.bf16.mxu0 0
      %641 = vmatpush1.bf16.msra.mxu0 0
      %642 = vmatprep.subr.bf16.mxu0 0
      %643 = vmatpush1.bf16.msra.mxu0 0
      %644 = vmatprep.subr.bf16.mxu0 0
      %645 = vmatpush1.bf16.msra.mxu0 0
      %646 = vmatprep.subr.bf16.mxu0 0
      %647 = vmatpush1.bf16.msra.mxu0 0
      %648 = vmatprep.subr.bf16.mxu0 0
      %649 = vmatpush1.bf16.msra.mxu0 %v632
      %650 = vmatprep.subr.bf16.mxu0 0
      %651 = vmatpush2.bf16.msra.mxu0 0
      %652 = vmatprep.subr.bf16.mxu0 0
      %653 = vmatpush2.bf16.msra.mxu0 0
      %654 = vmatprep.subr.bf16.mxu0 0
      %655 = vmatpush2.bf16.msra.mxu0 0
      %656 = vmatprep.subr.bf16.mxu0 0
      %657 = vmatpush2.bf16.msra.mxu0 0
      %658 = vmatprep.subr.bf16.mxu0 0
      %659 = vmatpush2.bf16.msra.mxu0 0
      %660 = vmatprep.subr.bf16.mxu0 0
      %661 = vmatpush2.bf16.msra.mxu0 0
      %662 = vmatprep.subr.bf16.mxu0 0
      %663 = vmatpush2.bf16.msra.mxu0 0
      %664 = vmatprep.subr.bf16.mxu0 0
      %665 = vmatpush2.bf16.msra.mxu0 0
      %666 = vmatprep.mubr.bf16.mxu0 0
      %667 = vmatmul.mubr.bf16.gmra.mxu0 %v607
      %v668 = vpop.f32.mrf.mxu0
      %v669 = vadd.f32 %v498, %v668
      %v670 = vpop.f32.mrf.mxu0
      %v671 = vpop.f32.mrf.mxu0
      %v672 = vadd.f32 %v501, %v671
      %v673 = vpop.f32.mrf.mxu0
      %674 = vmatprep.mubr.bf16.mxu0 0
      %675 = vmatmul.mubr.bf16.gmra.mxu0 %v610
      %v676 = vpop.f32.mrf.mxu0
      %v677 = vadd.f32 %v506, %v676
      %v678 = vpop.f32.mrf.mxu0
      %v679 = vpop.f32.mrf.mxu0
      %v680 = vadd.f32 %v509, %v679
      %v681 = vpop.f32.mrf.mxu0
      %682 = vmatprep.mubr.bf16.mxu0 0
      %683 = vmatmul.mubr.bf16.gmra.mxu0 %v613
      %v684 = vpop.f32.mrf.mxu0
      %v685 = vadd.f32 %v514, %v684
      %v686 = vpop.f32.mrf.mxu0
      %v687 = vpop.f32.mrf.mxu0
      %v688 = vadd.f32 %v517, %v687
      %v689 = vpop.f32.mrf.mxu0
      %690 = vmatprep.mubr.bf16.mxu0 0
      %691 = vmatmul.mubr.bf16.gmra.mxu0 %v616
      %v692 = vpop.f32.mrf.mxu0
      %v693 = vadd.f32 %v522, %v692
      %v694 = vpop.f32.mrf.mxu0
      %v695 = vpop.f32.mrf.mxu0
      %v696 = vadd.f32 %v525, %v695
      %v697 = vpop.f32.mrf.mxu0
      %698 = vmatprep.mubr.bf16.mxu0 0
      %699 = vmatmul.mubr.bf16.gmra.mxu0 %v619
      %v700 = vpop.f32.mrf.mxu0
      %v701 = vadd.f32 %v530, %v700
      %v702 = vpop.f32.mrf.mxu0
      %v703 = vpop.f32.mrf.mxu0
      %v704 = vadd.f32 %v533, %v703
      %v705 = vpop.f32.mrf.mxu0
      %706 = vmatprep.mubr.bf16.mxu0 0
      %707 = vmatmul.mubr.bf16.gmra.mxu0 %v622
      %v708 = vpop.f32.mrf.mxu0
      %v709 = vadd.f32 %v538, %v708
      %v710 = vpop.f32.mrf.mxu0
      %v711 = vpop.f32.mrf.mxu0
      %v712 = vadd.f32 %v541, %v711
      %v713 = vpop.f32.mrf.mxu0
      %714 = vmatprep.mubr.bf16.mxu0 0
      %715 = vmatmul.mubr.bf16.gmra.mxu0 %v625
      %v716 = vpop.f32.mrf.mxu0
      %v717 = vadd.f32 %v546, %v716
      %v718 = vpop.f32.mrf.mxu0
      %v719 = vpop.f32.mrf.mxu0
      %v720 = vadd.f32 %v549, %v719
      %v721 = vpop.f32.mrf.mxu0
      %722 = vmatprep.mubr.bf16.mxu0 0
      %723 = vmatmul.mubr.bf16.gmra.mxu0 %v628
      %v724 = vpop.f32.mrf.mxu0
      %v725 = vadd.f32 %v554, %v724
      %v726 = vpop.f32.mrf.mxu0
      %v727 = vpop.f32.mrf.mxu0
      %v728 = vadd.f32 %v557, %v727
      %v729 = vpop.f32.mrf.mxu0
      %730 = vdwg.mxu0
      %v731 = vld [vmem:[%s4] sm:$0x1]
      %v733 = vlaneseq
      %v734 = vshrl.u32 %v733, 7
      %v735 = vsub.s32 0, %v734
      %v736 = vrot.slane %v731, %v735
      %v738 = vadd.f32 %v669, %v736
      %v739 = vadd.f32 %v672, %v736
      %v740 = vadd.f32 %v677, %v736
      %v741 = vadd.f32 %v680, %v736
      %v742 = vadd.f32 %v685, %v736
      %v743 = vadd.f32 %v688, %v736
      %v744 = vadd.f32 %v693, %v736
      %v745 = vadd.f32 %v696, %v736
      %v746 = vadd.f32 %v701, %v736
      %v747 = vadd.f32 %v704, %v736
      %v748 = vadd.f32 %v709, %v736
      %v749 = vadd.f32 %v712, %v736
      %v750 = vadd.f32 %v717, %v736
      %v751 = vadd.f32 %v720, %v736
      %v752 = vadd.f32 %v725, %v736
      %v753 = vadd.f32 %v728, %v736
      %v754 = vmax.f32 %v738, 0.0
      %v755 = vmax.f32 %v739, 0.0
      %v756 = vmax.f32 %v740, 0.0
      %v757 = vmax.f32 %v741, 0.0
      %v758 = vmax.f32 %v742, 0.0
      %v759 = vmax.f32 %v743, 0.0
      %v760 = vmax.f32 %v744, 0.0
      %v761 = vmax.f32 %v745, 0.0
      %v762 = vmax.f32 %v746, 0.0
      %v763 = vmax.f32 %v747, 0.0
      %v764 = vmax.f32 %v748, 0.0
      %v765 = vmax.f32 %v749, 0.0
      %v766 = vmax.f32 %v750, 0.0
      %v767 = vmax.f32 %v751, 0.0
      %v768 = vmax.f32 %v752, 0.0
      %v769 = vmax.f32 %v753, 0.0
      %v770 = vpack.c.bf16 %v755, %v754
      %v771 = vpack.c.bf16 %v757, %v756
      %v772 = vpack.c.bf16 %v759, %v758
      %v773 = vpack.c.bf16 %v761, %v760
      %v774 = vpack.c.bf16 %v763, %v762
      %v775 = vpack.c.bf16 %v765, %v764
      %v776 = vpack.c.bf16 %v767, %v766
      %v777 = vpack.c.bf16 %v769, %v768
      %v778 = vld [vmem:[%s5] sm:$0xf]
      %v779 = vld [vmem:[%s5 + $0x4] sm:$0xf]
      %v780 = vld [vmem:[%s5 + $0x8] sm:$0xf]
      %v781 = vld [vmem:[%s5 + $0xc] sm:$0xf]
      %v782 = vld [vmem:[%s5 + $0x10] sm:$0xf]
      %v783 = vld [vmem:[%s5 + $0x14] sm:$0xf]
      %v784 = vld [vmem:[%s5 + $0x18] sm:$0xf]
      %v785 = vld [vmem:[%s5 + $0x1c] sm:$0xf]
      %v786 = vld [vmem:[%s6] sm:$0x1]
      %v788 = vlaneseq
      %v789 = vshrl.u32 %v788, 7
      %v790 = vsub.s32 0, %v789
      %v791 = vrot.slane %v786, %v790
      %v801 = vunpack.c.l.b16 %v778
      %v802 = vunpack.c.l.b16 %v779
      %v803 = vunpack.c.l.b16 %v780
      %v804 = vunpack.c.l.b16 %v781
      %v805 = vunpack.c.l.b16 %v782
      %v806 = vunpack.c.l.b16 %v783
      %v807 = vunpack.c.l.b16 %v784
      %v808 = vunpack.c.l.b16 %v785
      %v809 = vpack.c.b16 %v802, %v801
      %v810 = vpack.c.b16 %v804, %v803
      %v811 = vpack.c.b16 %v806, %v805
      %v812 = vpack.c.b16 %v808, %v807
      %vm817 = vcmask 523264
      %v819 = vsel %vm817, %v770, 0
      %v822 = vsel %vm817, %v771, 0
      %v825 = vsel %vm817, %v772, 0
      %v828 = vsel %vm817, %v773, 0
      %v831 = vsel %vm817, %v774, 0
      %v834 = vsel %vm817, %v775, 0
      %v837 = vsel %vm817, %v776, 0
      %v840 = vsel %vm817, %v777, 0
      %842 = vmatprep.subr.bf16.mxu0 0
      %843 = vmatpush1.bf16.msra.mxu0 0
      %844 = vmatprep.subr.bf16.mxu0 0
      %845 = vmatpush1.bf16.msra.mxu0 0
      %846 = vmatprep.subr.bf16.mxu0 0
      %847 = vmatpush1.bf16.msra.mxu0 0
      %848 = vmatprep.subr.bf16.mxu0 0
      %849 = vmatpush1.bf16.msra.mxu0 0
      %850 = vmatprep.subr.bf16.mxu0 0
      %851 = vmatpush1.bf16.msra.mxu0 %v812
      %852 = vmatprep.subr.bf16.mxu0 0
      %853 = vmatpush1.bf16.msra.mxu0 %v811
      %854 = vmatprep.subr.bf16.mxu0 0
      %855 = vmatpush1.bf16.msra.mxu0 %v810
      %856 = vmatprep.subr.bf16.mxu0 0
      %857 = vmatpush1.bf16.msra.mxu0 %v809
      %858 = vmatprep.subr.bf16.mxu0 0
      %859 = vmatpush2.bf16.msra.mxu0 0
      %860 = vmatprep.subr.bf16.mxu0 0
      %861 = vmatpush2.bf16.msra.mxu0 0
      %862 = vmatprep.subr.bf16.mxu0 0
      %863 = vmatpush2.bf16.msra.mxu0 0
      %864 = vmatprep.subr.bf16.mxu0 0
      %865 = vmatpush2.bf16.msra.mxu0 0
      %866 = vmatprep.subr.bf16.mxu0 0
      %867 = vmatpush2.bf16.msra.mxu0 0
      %868 = vmatprep.subr.bf16.mxu0 0
      %869 = vmatpush2.bf16.msra.mxu0 0
      %870 = vmatprep.subr.bf16.mxu0 0
      %871 = vmatpush2.bf16.msra.mxu0 0
      %872 = vmatprep.subr.bf16.mxu0 0
      %873 = vmatpush2.bf16.msra.mxu0 0
      %874 = vmatprep.mubr.bf16.mxu0 0
      %875 = vmatmul.mubr.bf16.gmra.mxu0 %v819
      %v876 = vpop.f32.mrf.mxu0
      %v877 = vadd.f32 %v791, %v876
      %v878 = vpop.f32.mrf.mxu0
      %v879 = vpop.f32.mrf.mxu0
      %v880 = vadd.f32 %v791, %v879
      %v881 = vpop.f32.mrf.mxu0
      %882 = vmatprep.mubr.bf16.mxu0 0
      %883 = vmatmul.mubr.bf16.gmra.mxu0 %v822
      %v884 = vpop.f32.mrf.mxu0
      %v885 = vadd.f32 %v791, %v884
      %v886 = vpop.f32.mrf.mxu0
      %v887 = vpop.f32.mrf.mxu0
      %v888 = vadd.f32 %v791, %v887
      %v889 = vpop.f32.mrf.mxu0
      %890 = vmatprep.mubr.bf16.mxu0 0
      %891 = vmatmul.mubr.bf16.gmra.mxu0 %v825
      %v892 = vpop.f32.mrf.mxu0
      %v893 = vadd.f32 %v791, %v892
      %v894 = vpop.f32.mrf.mxu0
      %v895 = vpop.f32.mrf.mxu0
      %v896 = vadd.f32 %v791, %v895
      %v897 = vpop.f32.mrf.mxu0
      %898 = vmatprep.mubr.bf16.mxu0 0
      %899 = vmatmul.mubr.bf16.gmra.mxu0 %v828
      %v900 = vpop.f32.mrf.mxu0
      %v901 = vadd.f32 %v791, %v900
      %v902 = vpop.f32.mrf.mxu0
      %v903 = vpop.f32.mrf.mxu0
      %v904 = vadd.f32 %v791, %v903
      %v905 = vpop.f32.mrf.mxu0
      %906 = vmatprep.mubr.bf16.mxu0 0
      %907 = vmatmul.mubr.bf16.gmra.mxu0 %v831
      %v908 = vpop.f32.mrf.mxu0
      %v909 = vadd.f32 %v791, %v908
      %v910 = vpop.f32.mrf.mxu0
      %v911 = vpop.f32.mrf.mxu0
      %v912 = vadd.f32 %v791, %v911
      %v913 = vpop.f32.mrf.mxu0
      %914 = vmatprep.mubr.bf16.mxu0 0
      %915 = vmatmul.mubr.bf16.gmra.mxu0 %v834
      %v916 = vpop.f32.mrf.mxu0
      %v917 = vadd.f32 %v791, %v916
      %v918 = vpop.f32.mrf.mxu0
      %v919 = vpop.f32.mrf.mxu0
      %v920 = vadd.f32 %v791, %v919
      %v921 = vpop.f32.mrf.mxu0
      %922 = vmatprep.mubr.bf16.mxu0 0
      %923 = vmatmul.mubr.bf16.gmra.mxu0 %v837
      %v924 = vpop.f32.mrf.mxu0
      %v925 = vadd.f32 %v791, %v924
      %v926 = vpop.f32.mrf.mxu0
      %v927 = vpop.f32.mrf.mxu0
      %v928 = vadd.f32 %v791, %v927
      %v929 = vpop.f32.mrf.mxu0
      %930 = vmatprep.mubr.bf16.mxu0 0
      %931 = vmatmul.mubr.bf16.gmra.mxu0 %v840
      %v932 = vpop.f32.mrf.mxu0
      %v933 = vadd.f32 %v791, %v932
      %v934 = vpop.f32.mrf.mxu0
      %v935 = vpop.f32.mrf.mxu0
      %v936 = vadd.f32 %v791, %v935
      %v937 = vpop.f32.mrf.mxu0
      %938 = vdwg.mxu0
      %v939 = vmax.f32 %v877, 0.0
      %v940 = vmax.f32 %v880, 0.0
      %v941 = vmax.f32 %v885, 0.0
      %v942 = vmax.f32 %v888, 0.0
      %v943 = vmax.f32 %v893, 0.0
      %v944 = vmax.f32 %v896, 0.0
      %v945 = vmax.f32 %v901, 0.0
      %v946 = vmax.f32 %v904, 0.0
      %v947 = vmax.f32 %v909, 0.0
      %v948 = vmax.f32 %v912, 0.0
      %v949 = vmax.f32 %v917, 0.0
      %v950 = vmax.f32 %v920, 0.0
      %v951 = vmax.f32 %v925, 0.0
      %v952 = vmax.f32 %v928, 0.0
      %v953 = vmax.f32 %v933, 0.0
      %v954 = vmax.f32 %v936, 0.0
      %v955 = vpack.c.bf16 %v940, %v939
      %v956 = vpack.c.bf16 %v942, %v941
      %v957 = vpack.c.bf16 %v944, %v943
      %v958 = vpack.c.bf16 %v946, %v945
      %v959 = vpack.c.bf16 %v948, %v947
      %v960 = vpack.c.bf16 %v950, %v949
      %v961 = vpack.c.bf16 %v952, %v951
      %v962 = vpack.c.bf16 %v954, %v953
      %v963 = vld [vmem:[%s7] sm:$0xf]
      %v964 = vld [vmem:[%s7 + $0x4] sm:$0xf]
      %v965 = vld [vmem:[%s7 + $0x8] sm:$0xf]
      %v966 = vld [vmem:[%s7 + $0xc] sm:$0xf]
      %v967 = vld [vmem:[%s7 + $0x10] sm:$0xf]
      %v968 = vld [vmem:[%s7 + $0x14] sm:$0xf]
      %v969 = vld [vmem:[%s7 + $0x18] sm:$0xf]
      %v970 = vld [vmem:[%s7 + $0x1c] sm:$0xf]
      %v971 = vld [vmem:[%s8] sm:$0x1]
      %v973 = vlaneseq
      %v974 = vshrl.u32 %v973, 7
      %v975 = vsub.s32 0, %v974
      %v976 = vrot.slane %v971, %v975
      %v986 = vunpack.c.l.b16 %v963
      %v987 = vunpack.c.l.b16 %v964
      %v988 = vunpack.c.l.b16 %v965
      %v989 = vunpack.c.l.b16 %v966
      %v990 = vunpack.c.l.b16 %v967
      %v991 = vunpack.c.l.b16 %v968
      %v992 = vunpack.c.l.b16 %v969
      %v993 = vunpack.c.l.b16 %v970
      %v994 = vpack.c.b16 %v987, %v986
      %v995 = vpack.c.b16 %v989, %v988
      %v996 = vpack.c.b16 %v991, %v990
      %v997 = vpack.c.b16 %v993, %v992
      %v1003 = vsel %vm817, %v955, 0
      %v1006 = vsel %vm817, %v956, 0
      %v1009 = vsel %vm817, %v957, 0
      %v1012 = vsel %vm817, %v958, 0
      %v1015 = vsel %vm817, %v959, 0
      %v1018 = vsel %vm817, %v960, 0
      %v1021 = vsel %vm817, %v961, 0
      %v1024 = vsel %vm817, %v962, 0
      %1026 = vmatprep.subr.bf16.mxu0 0
      %1027 = vmatpush1.bf16.msra.mxu0 0
      %1028 = vmatprep.subr.bf16.mxu0 0
      %1029 = vmatpush1.bf16.msra.mxu0 0
      %1030 = vmatprep.subr.bf16.mxu0 0
      %1031 = vmatpush1.bf16.msra.mxu0 0
      %1032 = vmatprep.subr.bf16.mxu0 0
      %1033 = vmatpush1.bf16.msra.mxu0 0
      %1034 = vmatprep.subr.bf16.mxu0 0
      %1035 = vmatpush1.bf16.msra.mxu0 %v997
      %1036 = vmatprep.subr.bf16.mxu0 0
      %1037 = vmatpush1.bf16.msra.mxu0 %v996
      %1038 = vmatprep.subr.bf16.mxu0 0
      %1039 = vmatpush1.bf16.msra.mxu0 %v995
      %1040 = vmatprep.subr.bf16.mxu0 0
      %1041 = vmatpush1.bf16.msra.mxu0 %v994
      %1042 = vmatprep.subr.bf16.mxu0 0
      %1043 = vmatpush2.bf16.msra.mxu0 0
      %1044 = vmatprep.subr.bf16.mxu0 0
      %1045 = vmatpush2.bf16.msra.mxu0 0
      %1046 = vmatprep.subr.bf16.mxu0 0
      %1047 = vmatpush2.bf16.msra.mxu0 0
      %1048 = vmatprep.subr.bf16.mxu0 0
      %1049 = vmatpush2.bf16.msra.mxu0 0
      %1050 = vmatprep.subr.bf16.mxu0 0
      %1051 = vmatpush2.bf16.msra.mxu0 0
      %1052 = vmatprep.subr.bf16.mxu0 0
      %1053 = vmatpush2.bf16.msra.mxu0 0
      %1054 = vmatprep.subr.bf16.mxu0 0
      %1055 = vmatpush2.bf16.msra.mxu0 0
      %1056 = vmatprep.subr.bf16.mxu0 0
      %1057 = vmatpush2.bf16.msra.mxu0 0
      %1058 = vmatprep.mubr.bf16.mxu0 0
      %1059 = vmatmul.mubr.bf16.gmra.mxu0 %v1003
      %v1060 = vpop.f32.mrf.mxu0
      %v1061 = vadd.f32 %v976, %v1060
      %v1062 = vpop.f32.mrf.mxu0
      %v1063 = vpop.f32.mrf.mxu0
      %v1064 = vadd.f32 %v976, %v1063
      %v1065 = vpop.f32.mrf.mxu0
      %1066 = vmatprep.mubr.bf16.mxu0 0
      %1067 = vmatmul.mubr.bf16.gmra.mxu0 %v1006
      %v1068 = vpop.f32.mrf.mxu0
      %v1069 = vadd.f32 %v976, %v1068
      %v1070 = vpop.f32.mrf.mxu0
      %v1071 = vpop.f32.mrf.mxu0
      %v1072 = vadd.f32 %v976, %v1071
      %v1073 = vpop.f32.mrf.mxu0
      %1074 = vmatprep.mubr.bf16.mxu0 0
      %1075 = vmatmul.mubr.bf16.gmra.mxu0 %v1009
      %v1076 = vpop.f32.mrf.mxu0
      %v1077 = vadd.f32 %v976, %v1076
      %v1078 = vpop.f32.mrf.mxu0
      %v1079 = vpop.f32.mrf.mxu0
      %v1080 = vadd.f32 %v976, %v1079
      %v1081 = vpop.f32.mrf.mxu0
      %1082 = vmatprep.mubr.bf16.mxu0 0
      %1083 = vmatmul.mubr.bf16.gmra.mxu0 %v1012
      %v1084 = vpop.f32.mrf.mxu0
      %v1085 = vadd.f32 %v976, %v1084
      %v1086 = vpop.f32.mrf.mxu0
      %v1087 = vpop.f32.mrf.mxu0
      %v1088 = vadd.f32 %v976, %v1087
      %v1089 = vpop.f32.mrf.mxu0
      %1090 = vmatprep.mubr.bf16.mxu0 0
      %1091 = vmatmul.mubr.bf16.gmra.mxu0 %v1015
      %v1092 = vpop.f32.mrf.mxu0
      %v1093 = vadd.f32 %v976, %v1092
      %v1094 = vpop.f32.mrf.mxu0
      %v1095 = vpop.f32.mrf.mxu0
      %v1096 = vadd.f32 %v976, %v1095
      %v1097 = vpop.f32.mrf.mxu0
      %1098 = vmatprep.mubr.bf16.mxu0 0
      %1099 = vmatmul.mubr.bf16.gmra.mxu0 %v1018
      %v1100 = vpop.f32.mrf.mxu0
      %v1101 = vadd.f32 %v976, %v1100
      %v1102 = vpop.f32.mrf.mxu0
      %v1103 = vpop.f32.mrf.mxu0
      %v1104 = vadd.f32 %v976, %v1103
      %v1105 = vpop.f32.mrf.mxu0
      %1106 = vmatprep.mubr.bf16.mxu0 0
      %1107 = vmatmul.mubr.bf16.gmra.mxu0 %v1021
      %v1108 = vpop.f32.mrf.mxu0
      %v1109 = vadd.f32 %v976, %v1108
      %v1110 = vpop.f32.mrf.mxu0
      %v1111 = vpop.f32.mrf.mxu0
      %v1112 = vadd.f32 %v976, %v1111
      %v1113 = vpop.f32.mrf.mxu0
      %1114 = vmatprep.mubr.bf16.mxu0 0
      %1115 = vmatmul.mubr.bf16.gmra.mxu0 %v1024
      %v1116 = vpop.f32.mrf.mxu0
      %v1117 = vadd.f32 %v976, %v1116
      %v1118 = vpop.f32.mrf.mxu0
      %v1119 = vpop.f32.mrf.mxu0
      %v1120 = vadd.f32 %v976, %v1119
      %v1121 = vpop.f32.mrf.mxu0
      %1122 = vdwg.mxu0
      %vm1123 = vcmask 15360
      %1124 = vst.msk [vmem:[%s356] sm:$0xff] %vm1123, %v1061
      %1125 = vst.msk [vmem:[%s356 + $0x8] sm:$0xff] %vm1123, %v1064
      %1126 = vst.msk [vmem:[%s356 + $0x10] sm:$0xff] %vm1123, %v1069
      %1127 = vst.msk [vmem:[%s356 + $0x18] sm:$0xff] %vm1123, %v1072
      %1128 = vst.msk [vmem:[%s356 + $0x20] sm:$0xff] %vm1123, %v1077
      %1129 = vst.msk [vmem:[%s356 + $0x28] sm:$0xff] %vm1123, %v1080
      %1130 = vst.msk [vmem:[%s356 + $0x30] sm:$0xff] %vm1123, %v1085
      %1131 = vst.msk [vmem:[%s356 + $0x38] sm:$0xff] %vm1123, %v1088
      %1132 = vst.msk [vmem:[%s356 + $0x40] sm:$0xff] %vm1123, %v1093
      %1133 = vst.msk [vmem:[%s356 + $0x48] sm:$0xff] %vm1123, %v1096
      %1134 = vst.msk [vmem:[%s356 + $0x50] sm:$0xff] %vm1123, %v1101
      %1135 = vst.msk [vmem:[%s356 + $0x58] sm:$0xff] %vm1123, %v1104
      %1136 = vst.msk [vmem:[%s356 + $0x60] sm:$0xff] %vm1123, %v1109
      %1137 = vst.msk [vmem:[%s356 + $0x68] sm:$0xff] %vm1123, %v1112
      %1138 = vst.msk [vmem:[%s356 + $0x70] sm:$0xff] %vm1123, %v1117
      %1139 = vst.msk [vmem:[%s356 + $0x78] sm:$0xff] %vm1123, %v1120
      %s1140 = smul.u32 16, %s20
      %p1141 = scmp.lt.s32.totalorder %s1140, 31
      %s1142 = scalar_select %p1141, %s1140, 31
      %s1143 = smul.addr %s1142, 8
      %s1144 = scalar_lea.vmem %s9, %s1143
      // Predicated region
      $region57: #{tpu_custom_call.1} parent=55 // pred_check
        %p1145 = pneg %p237
      $region58: #{tpu_custom_call.1} parent=55 // pred_check_branch
        %1147 = sbr.rel (%p1145) target = $region60
      $region59: #{tpu_custom_call.1} parent=55 // pred_region
        %s1148 = smul.u32 16, %s20
      $region60: #{tpu_custom_call.1} parent=55 // pred_fallthru
        _
    $region56: #{tpu_custom_call.1} parent=5 // pred_fallthru
      _
    %p1149 = scmp.le.s32.totalorder 2, %s15
    // Predicated region
    $region61: #{tpu_custom_call.1} parent=5 // pred_check
      %p1150 = pneg %p1149
    $region62: #{tpu_custom_call.1} parent=5 // pred_check_branch
      %1152 = sbr.rel (%p1150) target = $region64
    $region63: #{tpu_custom_call.1} parent=5 // pred_region
      %s1153 = ssub.s32 %s15, 2
      // Predicated region
      $region65: #{tpu_custom_call.1} parent=63 // pred_check
        %p1154 = pneg %p243
      $region66: #{tpu_custom_call.1} parent=63 // pred_check_branch
        %1156 = sbr.rel (%p1154) target = $region68
      $region67: #{tpu_custom_call.1} parent=63 // pred_region
        %s1157 = smul.u32 16, %s21
        %p1158 = scmp.lt.s32.totalorder %s1157, 31
        %s1159 = scalar_select %p1158, %s1157, 31
        %s1160 = smul.addr %s1159, 8
        %s1161 = scalar_lea.vmem %s9, %s1160
      $region68: #{tpu_custom_call.1} parent=63 // pred_fallthru
        _
    $region64: #{tpu_custom_call.1} parent=5 // pred_fallthru
      _
  $region6: #{tpu_custom_call.1} parent=0 // loop_footer
    %s19 = sadd.s32 1, %s15
  $region7: #{tpu_custom_call.1} parent=0 // loop_footer_branch
    %14 = sbr.rel target = $region3
  $region8: #{tpu_custom_call.1} parent=0 // loop_exit
    _

</llo_original>
